<compile_context>
chip_gen: v6e
topology: v6e:2x2x1
jax: 0.10.0
libtpu: 0.0.40
codegen_flags: <defaults>
</compile_context>

<pallas_src>
import functools

import jax
import jax.numpy as jnp
import numpy as np
from jax import lax
from jax.experimental import pallas as pl
from jax.experimental.pallas import tpu as pltpu


def _round_up(a, b):
    return pl.cdiv(a, b) * b


def _gated_deconv_kernel(x_ref, w_ref, b_ref, o_ref, *scratch,
                         K, Wp, tm, cout, cin, win_len, fold, mxu_dtype):
    # x_ref : (1, Cin, Lq_in)    whole flattened zero-padded image (planar, q on lanes)
    # w_ref : (2*Cout, K*K*Cin)  folded flipped weights            (fold=True)
    #         (K*K, 2*Cout, Cin) per-tap flipped weights           (fold=False)
    # b_ref : (2*Cout, 1)        f32 bias
    # o_ref : (1, Cout, tm)      lane-dense output tile (tm multiple of 128)
    t = pl.program_id(1)
    q0 = pl.multiple_of(t * tm, 128)          # tile start in flattened-q space

    # One aligned window load per tile; every kernel tap (kh,kw) is a static
    # lane-shifted slice of it (offset kh*Wp + kw) -> no HBM im2col, ~1x read.
    win = x_ref[0, :, pl.ds(q0, win_len)]     # (Cin, win_len)

    if fold:
        # Fold the K*K taps into the MXU contraction dim: assemble the
        # (K*K*Cin, tm) patch in VMEM scratch, then a single big dot.
        patch_ref = scratch[0]
        win_f32 = win.astype(jnp.float32)
        for kh in range(K):
            for kw in range(K):
                off = kh * Wp + kw            # static per-tap offset
                tap = kh * K + kw
                patch_ref[tap * cin:(tap + 1) * cin, :] = win_f32[:, off:off + tm]
        acc = jnp.dot(w_ref[...], patch_ref[...].astype(mxu_dtype),
                      preferred_element_type=jnp.float32)          # (2*Cout, tm)
    else:
        acc = jnp.zeros((2 * cout, tm), jnp.float32)
        for kh in range(K):
            for kw in range(K):
                off = kh * Wp + kw
                slab = win[:, off:off + tm].astype(mxu_dtype)      # (Cin, tm)
                acc = acc + jnp.dot(w_ref[kh * K + kw], slab,
                                    preferred_element_type=jnp.float32)

    acc = acc + b_ref[...]                    # (2*Cout, 1) broadcasts over lanes

    # chunk(2, dim=channel): x rows [0, Cout), mask rows [Cout, 2*Cout).
    # Hardsigmoid(mask) = clip(mask/6 + 0.5, 0, 1); gating stays f32 on the VPU.
    gate = jnp.clip(acc[cout:, :] * (1.0 / 6.0) + 0.5, 0.0, 1.0)
    o_ref[0, :, :] = (acc[:cout, :] * gate).astype(o_ref.dtype)


def gated_conv_transpose2d(x_nchw, weight, bias, *, tm=512, mxu_dtype=jnp.bfloat16):
    """ConvTranspose2d(Cin, 2*Cout, K, stride=1, pad=0) -> chunk(2, dim=1)
       -> x * hardsigmoid(mask).

    x_nchw: (N, Cin, H, W)
    weight: (Cin, 2*Cout, K, K)   PyTorch ConvTranspose2d layout
    bias:   (2*Cout,)
    returns (N, Cout, H+K-1, W+K-1), dtype of x.
    """
    N, Cin, H, W = x_nchw.shape
    _, C2, KH, KW = weight.shape
    assert KH == KW, "square kernels only"
    K = KH
    Cout = C2 // 2
    OH, OW = H + K - 1, W + K - 1
    Hp, Wp = H + 2 * (K - 1), W + 2 * (K - 1)

    # Flattened-q trick: output pixels are indexed q = oh*Wp + ow (row stride Wp),
    # so tap (kh,kw) reads the flattened zero-padded image at the constant offset
    # kh*Wp + kw.  Columns ow in [OW, Wp) are junk and stripped afterwards.
    Lq_out = OH * Wp

    tm = int(max(128, min(int(tm), int(_round_up(Lq_out, 128)))))
    tm = int(_round_up(tm, 128))
    if N == 1 and int(_round_up(Lq_out, 128)) > 128 and int(_round_up(Lq_out, tm)) // tm < 2:
        # keep both TensorCores busy on dual-TC chips when batch == 1
        tm = int(_round_up(pl.cdiv(Lq_out, 2), 128))
    Lq_pad = int(_round_up(Lq_out, tm))
    n_tiles = Lq_pad // tm
    max_off = (K - 1) * Wp + (K - 1)
    halo = int(_round_up(max_off, 128))
    win_len = tm + halo            # per-tile aligned window (tile + tap halo)
    Lq_in = Lq_pad + halo          # flat length so the last tile's window is in-bounds

    # Planar (N, Cin, Lq) layout: no NCHW->NHWC transpose; q is the lane axis; x is
    # stored in the MXU dtype (bf16 default) to halve HBM traffic / VMEM footprint.
    x_pad = jnp.pad(x_nchw, ((0, 0), (0, 0), (K - 1, K - 1), (K - 1, K - 1)))
    xf = x_pad.reshape(N, Cin, Hp * Wp)
    xf = jnp.pad(xf, ((0, 0), (0, 0), (0, Lq_in - Hp * Wp))).astype(mxu_dtype)

    # Transposed conv (stride 1 / pad 0) == full correlation with the flipped
    # kernel.  Fuse x-branch and mask-branch into one (2*Cout, ...) weight; for
    # small channel counts also fold the K*K taps into the contraction dim.
    w_flip = weight[:, :, ::-1, ::-1]                        # (Cin, 2*Cout, K, K)
    kkc = K * K * Cin
    fold = kkc <= 512
    if fold:
        # patch rows are ordered (kh, kw, ci) -> tap*Cin + ci; weight matches.
        wf = jnp.transpose(w_flip, (1, 2, 3, 0)).reshape(C2, kkc).astype(mxu_dtype)
        w_spec = pl.BlockSpec((C2, kkc), lambda n, t: (0, 0))
        scratch_shapes = [pltpu.VMEM((kkc, tm), jnp.float32)]
    else:
        wf = jnp.transpose(w_flip, (2, 3, 1, 0)).reshape(K * K, C2, Cin).astype(mxu_dtype)
        w_spec = pl.BlockSpec((K * K, C2, Cin), lambda n, t: (0, 0, 0))
        scratch_shapes = []
    bf = bias.astype(jnp.float32).reshape(C2, 1)

    kernel = functools.partial(
        _gated_deconv_kernel, K=K, Wp=Wp, tm=tm, cout=Cout, cin=Cin,
        win_len=win_len, fold=fold, mxu_dtype=mxu_dtype)

    # --- VMEM budget (double-buffered pipeline blocks + scratch + temporaries) ---
    isz = int(np.dtype(mxu_dtype).itemsize)
    osz = int(np.dtype(x_nchw.dtype).itemsize)

    def _pad_sub(rows, itemsize):        # sublane padding of the second-minor dim
        return int(_round_up(rows, 8 * (4 // itemsize)))

    x_blk = _pad_sub(Cin, isz) * Lq_in * isz
    if fold:
        w_blk = _pad_sub(C2, isz) * int(_round_up(kkc, 128)) * isz
        patch_blk = _pad_sub(kkc, 4) * tm * 4
    else:
        w_blk = K * K * _pad_sub(C2, isz) * int(_round_up(Cin, 128)) * isz
        patch_blk = 0
    o_blk = _pad_sub(Cout, osz) * tm * osz
    est_vmem = (2 * (x_blk + w_blk + o_blk + 8 * 128 * 4)
                + patch_blk + 4 * _pad_sub(C2, 4) * tm * 4 + (2 << 20))

    try:
        phys_vmem = int(pltpu.get_tpu_info().vmem_capacity_bytes)
    except Exception:
        phys_vmem = 64 * 1024 * 1024     # conservative: v7x has the smallest VMEM
    cp_kwargs = dict(dimension_semantics=("parallel", "parallel"))
    if est_vmem > 30 * 1024 * 1024:
        cp_kwargs["vmem_limit_bytes"] = int(min(est_vmem * 5 // 4, phys_vmem * 9 // 10))
    # TODO(synk): for images whose flattened plane no longer fits VMEM (notably
    # v7x's 64 MiB) switch the x input to memory_space=pl.ANY and stream per-tile
    # halo windows with a manually double-buffered pltpu.make_async_copy.

    out = pl.pallas_call(
        kernel,
        out_shape=jax.ShapeDtypeStruct((N, Cout, Lq_pad), x_nchw.dtype),
        grid_spec=pltpu.PrefetchScalarGridSpec(
            num_scalar_prefetch=0,
            grid=(N, n_tiles),
            in_specs=[
                # whole flattened image; block index constant over t -> fetched
                # once per image by the pipeline
                pl.BlockSpec((1, Cin, Lq_in), lambda n, t: (n, 0, 0)),
                w_spec,
                pl.BlockSpec((C2, 1), lambda n, t: (0, 0)),
            ],
            out_specs=pl.BlockSpec((1, Cout, tm), lambda n, t: (n, 0, t)),
            scratch_shapes=scratch_shapes,
        ),
        compiler_params=pltpu.CompilerParams(**cp_kwargs),
    )(xf, wf, bf)

    # Strip the strided-q padding: (N, Cout, Lq_pad) -> (N, Cout, OH, OW); already NCHW.
    out = out[:, :, :Lq_out].reshape(N, Cout, OH, Wp)[:, :, :, :OW]
    return out


def _reference(x_nchw, weight, bias):
    """Pure-JAX reference matching PyTorch ConvTranspose2d + gated hardsigmoid."""
    C2 = weight.shape[1]
    K = weight.shape[2]
    Cout = C2 // 2
    rhs = jnp.transpose(weight[:, :, ::-1, ::-1], (1, 0, 2, 3))  # (C2, Cin, K, K)
    y = lax.conv_general_dilated(
        x_nchw, rhs, window_strides=(1, 1),
        padding=[(K - 1, K - 1), (K - 1, K - 1)],
        dimension_numbers=("NCHW", "OIHW", "NCHW"),
        precision=lax.Precision.HIGHEST)
    y = y + bias.reshape(1, C2, 1, 1)
    xv, mv = y[:, :Cout], y[:, Cout:]
    gate = jnp.clip(mv / 6.0 + 0.5, 0.0, 1.0)
    return xv * gate


if __name__ == "__main__":
    key = jax.random.PRNGKey(0)
    k1, k2, k3 = jax.random.split(key, 3)

    N, Cin, H, W = 2, 4, 16, 16
    Cout, K = 4, 3

    x = jax.random.normal(k1, (N, Cin, H, W), dtype=jnp.float32)
    # deterministic synthetic parameters (PyTorch ConvTranspose2d weight layout)
    weight = jax.random.normal(k2, (Cin, 2 * Cout, K, K), dtype=jnp.float32) * 0.1
    bias = jax.random.normal(k3, (2 * Cout,), dtype=jnp.float32) * 0.1

    ref = _reference(x, weight, bias)

    run = jax.jit(gated_conv_transpose2d, static_argnames=("tm", "mxu_dtype"))

    # exact-path check: f32 operands end-to-end
    out_f32 = jax.block_until_ready(run(x, weight, bias, tm=512, mxu_dtype=jnp.float32))
    assert out_f32.shape == (N, Cout, H + K - 1, W + K - 1)
    np.testing.assert_allclose(np.asarray(out_f32), np.asarray(ref), rtol=1e-4, atol=1e-4)

    # default fast path: bf16 storage + MXU operands, f32 accumulate / f32 epilogue
    out_bf16 = jax.block_until_ready(run(x, weight, bias, tm=512, mxu_dtype=jnp.bfloat16))
    assert out_bf16.shape == (N, Cout, H + K - 1, W + K - 1)
    np.testing.assert_allclose(np.asarray(out_bf16), np.asarray(ref), rtol=5e-2, atol=5e-2)

    print("KERNEL_OK")
</pallas_src>

<mosaic_0001>
module attributes {stable_mosaic.version = 11 : i64} {
  func.func @_gated_deconv_kernel(%arg0: i32, %arg1: i32, %arg2: memref<1x4x512xf32, #tpu.memory_space<vmem>>, %arg3: memref<8x36xf32, #tpu.memory_space<vmem>>, %arg4: memref<8x1xf32, #tpu.memory_space<vmem>>, %arg5: memref<1x4x384xf32, #tpu.memory_space<vmem>>, %arg6: memref<36x384xf32, #tpu.memory_space<vmem>>) attributes {dimension_semantics = [#tpu.dimension_semantics<parallel>, #tpu.dimension_semantics<parallel>], iteration_bounds = array<i64: 2, 1>, scalar_prefetch = 0 : i64, scratch_operands = 1 : i64, tpu.core_type = #tpu.core_type<tc>, window_params = [{transform_indices = @transform_0, window_bounds = array<i64: 1, 4, 512>}, {pipeline_mode = #tpu.pipeline_mode<synchronous>, transform_indices = @transform_1, window_bounds = array<i64: 8, 36>}, {pipeline_mode = #tpu.pipeline_mode<synchronous>, transform_indices = @transform_2, window_bounds = array<i64: 8, 1>}, {transform_indices = @transform_3, window_bounds = array<i64: 1, 4, 384>}]} {
    %c384_i32 = arith.constant 384 : i32
    %0 = arith.muli %arg1, %c384_i32 : i32
    %1 = tpu.assume_multiple %0, 128 : i32
    %c0 = arith.constant 0 : index
    %c0_0 = arith.constant 0 : index
    %2 = arith.index_cast %1 : i32 to index
    %3 = vector.load %arg2[%c0, %c0_0, %2] : memref<1x4x512xf32, #tpu.memory_space<vmem>>, vector<1x4x512xf32>
    %4 = vector.shape_cast %3 : vector<1x4x512xf32> to vector<4x512xf32>
    %5 = vector.extract_strided_slice %4 {offsets = [0, 0], sizes = [4, 384], strides = [1, 1]} : vector<4x512xf32> to vector<4x384xf32>
    %c0_1 = arith.constant 0 : index
    %c0_2 = arith.constant 0 : index
    %6 = vector.load %arg6[%c0_1, %c0_2] : memref<36x384xf32, #tpu.memory_space<vmem>>, vector<4x384xf32>
    tpu.vector_store %arg6[%c0_1, %c0_2], %5 {strides = array<i32>} : memref<36x384xf32, #tpu.memory_space<vmem>>, vector<4x384xf32>,
    %7 = vector.extract_strided_slice %4 {offsets = [0, 1], sizes = [4, 384], strides = [1, 1]} : vector<4x512xf32> to vector<4x384xf32>
    %c4 = arith.constant 4 : index
    %c0_3 = arith.constant 0 : index
    %8 = vector.load %arg6[%c4, %c0_3] : memref<36x384xf32, #tpu.memory_space<vmem>>, vector<4x384xf32>
    tpu.vector_store %arg6[%c4, %c0_3], %7 {strides = array<i32>} : memref<36x384xf32, #tpu.memory_space<vmem>>, vector<4x384xf32>,
    %9 = vector.extract_strided_slice %4 {offsets = [0, 2], sizes = [4, 384], strides = [1, 1]} : vector<4x512xf32> to vector<4x384xf32>
    %c8 = arith.constant 8 : index
    %c0_4 = arith.constant 0 : index
    %10 = vector.load %arg6[%c8, %c0_4] : memref<36x384xf32, #tpu.memory_space<vmem>>, vector<4x384xf32>
    tpu.vector_store %arg6[%c8, %c0_4], %9 {strides = array<i32>} : memref<36x384xf32, #tpu.memory_space<vmem>>, vector<4x384xf32>,
    %11 = vector.extract_strided_slice %4 {offsets = [0, 20], sizes = [4, 384], strides = [1, 1]} : vector<4x512xf32> to vector<4x384xf32>
    %c12 = arith.constant 12 : index
    %c0_5 = arith.constant 0 : index
    %12 = vector.load %arg6[%c12, %c0_5] : memref<36x384xf32, #tpu.memory_space<vmem>>, vector<4x384xf32>
    tpu.vector_store %arg6[%c12, %c0_5], %11 {strides = array<i32>} : memref<36x384xf32, #tpu.memory_space<vmem>>, vector<4x384xf32>,
    %13 = vector.extract_strided_slice %4 {offsets = [0, 21], sizes = [4, 384], strides = [1, 1]} : vector<4x512xf32> to vector<4x384xf32>
    %c16 = arith.constant 16 : index
    %c0_6 = arith.constant 0 : index
    %14 = vector.load %arg6[%c16, %c0_6] : memref<36x384xf32, #tpu.memory_space<vmem>>, vector<4x384xf32>
    tpu.vector_store %arg6[%c16, %c0_6], %13 {strides = array<i32>} : memref<36x384xf32, #tpu.memory_space<vmem>>, vector<4x384xf32>,
    %15 = vector.extract_strided_slice %4 {offsets = [0, 22], sizes = [4, 384], strides = [1, 1]} : vector<4x512xf32> to vector<4x384xf32>
    %c20 = arith.constant 20 : index
    %c0_7 = arith.constant 0 : index
    %16 = vector.load %arg6[%c20, %c0_7] : memref<36x384xf32, #tpu.memory_space<vmem>>, vector<4x384xf32>
    tpu.vector_store %arg6[%c20, %c0_7], %15 {strides = array<i32>} : memref<36x384xf32, #tpu.memory_space<vmem>>, vector<4x384xf32>,
    %17 = vector.extract_strided_slice %4 {offsets = [0, 40], sizes = [4, 384], strides = [1, 1]} : vector<4x512xf32> to vector<4x384xf32>
    %c24 = arith.constant 24 : index
    %c0_8 = arith.constant 0 : index
    %18 = vector.load %arg6[%c24, %c0_8] : memref<36x384xf32, #tpu.memory_space<vmem>>, vector<4x384xf32>
    tpu.vector_store %arg6[%c24, %c0_8], %17 {strides = array<i32>} : memref<36x384xf32, #tpu.memory_space<vmem>>, vector<4x384xf32>,
    %19 = vector.extract_strided_slice %4 {offsets = [0, 41], sizes = [4, 384], strides = [1, 1]} : vector<4x512xf32> to vector<4x384xf32>
    %c28 = arith.constant 28 : index
    %c0_9 = arith.constant 0 : index
    %20 = vector.load %arg6[%c28, %c0_9] : memref<36x384xf32, #tpu.memory_space<vmem>>, vector<4x384xf32>
    tpu.vector_store %arg6[%c28, %c0_9], %19 {strides = array<i32>} : memref<36x384xf32, #tpu.memory_space<vmem>>, vector<4x384xf32>,
    %21 = vector.extract_strided_slice %4 {offsets = [0, 42], sizes = [4, 384], strides = [1, 1]} : vector<4x512xf32> to vector<4x384xf32>
    %c32 = arith.constant 32 : index
    %c0_10 = arith.constant 0 : index
    %22 = vector.load %arg6[%c32, %c0_10] : memref<36x384xf32, #tpu.memory_space<vmem>>, vector<4x384xf32>
    tpu.vector_store %arg6[%c32, %c0_10], %21 {strides = array<i32>} : memref<36x384xf32, #tpu.memory_space<vmem>>, vector<4x384xf32>,
    %c0_11 = arith.constant 0 : index
    %c0_12 = arith.constant 0 : index
    %23 = vector.load %arg3[%c0_11, %c0_12] : memref<8x36xf32, #tpu.memory_space<vmem>>, vector<8x36xf32>
    %c0_13 = arith.constant 0 : index
    %c0_14 = arith.constant 0 : index
    %24 = vector.load %arg6[%c0_13, %c0_14] : memref<36x384xf32, #tpu.memory_space<vmem>>, vector<36x384xf32>
    %cst = arith.constant dense<0.000000e+00> : vector<8x384xf32>
    %25 = tpu.matmul %23, %24, %cst {dimension_numbers = #tpu.dot_dimension_numbers<[1], [0], [0], [1], [0, 0, 1, 1], [], []>} : vector<8x36xf32>, vector<36x384xf32>, vector<8x384xf32> -> vector<8x384xf32>
    %c0_15 = arith.constant 0 : index
    %c0_16 = arith.constant 0 : index
    %26 = vector.load %arg4[%c0_15, %c0_16] : memref<8x1xf32, #tpu.memory_space<vmem>>, vector<8x1xf32>
    %27 = vector.broadcast %26 : vector<8x1xf32> to vector<8x384xf32>
    %28 = arith.addf %25, %27 : vector<8x384xf32>
    %29 = vector.extract_strided_slice %28 {offsets = [4, 0], sizes = [4, 384], strides = [1, 1]} : vector<8x384xf32> to vector<4x384xf32>
    %cst_17 = arith.constant 0.166666672 : f32
    %30 = vector.broadcast %cst_17 : f32 to vector<4x384xf32>
    %31 = arith.mulf %29, %30 : vector<4x384xf32>
    %cst_18 = arith.constant 5.000000e-01 : f32
    %32 = vector.broadcast %cst_18 : f32 to vector<4x384xf32>
    %33 = arith.addf %31, %32 : vector<4x384xf32>
    %cst_19 = arith.constant 0.000000e+00 : f32
    %cst_20 = arith.constant 1.000000e+00 : f32
    %34 = vector.broadcast %cst_19 : f32 to vector<4x384xf32>
    %35 = arith.maximumf %34, %33 : vector<4x384xf32>
    %36 = vector.broadcast %cst_20 : f32 to vector<4x384xf32>
    %37 = arith.minimumf %36, %35 : vector<4x384xf32>
    %38 = vector.extract_strided_slice %28 {offsets = [0, 0], sizes = [4, 384], strides = [1, 1]} : vector<8x384xf32> to vector<4x384xf32>
    %39 = arith.mulf %38, %37 : vector<4x384xf32>
    %c0_21 = arith.constant 0 : index
    %c0_22 = arith.constant 0 : index
    %c0_23 = arith.constant 0 : index
    %40 = vector.load %arg5[%c0_21, %c0_22, %c0_23] : memref<1x4x384xf32, #tpu.memory_space<vmem>>, vector<1x4x384xf32>
    %41 = vector.shape_cast %40 : vector<1x4x384xf32> to vector<4x384xf32>
    %42 = vector.shape_cast %39 : vector<4x384xf32> to vector<1x4x384xf32>
    tpu.vector_store %arg5[%c0_21, %c0_22, %c0_23], %42 {strides = array<i32>} : memref<1x4x384xf32, #tpu.memory_space<vmem>>, vector<1x4x384xf32>,
    return
  }
  func.func @transform_0(%arg0: i32, %arg1: i32) -> (i32, i32, i32) {
    %c0_i32 = arith.constant 0 : i32
    %c0_i32_0 = arith.constant 0 : i32
    %c0_i32_1 = arith.constant 0 : i32
    return %arg0, %c0_i32, %c0_i32_0 : i32, i32, i32
  }
  func.func @transform_1(%arg0: i32, %arg1: i32) -> (i32, i32) {
    %c0_i32 = arith.constant 0 : i32
    %c0_i32_0 = arith.constant 0 : i32
    %c0_i32_1 = arith.constant 0 : i32
    return %c0_i32, %c0_i32_0 : i32, i32
  }
  func.func @transform_2(%arg0: i32, %arg1: i32) -> (i32, i32) {
    %c0_i32 = arith.constant 0 : i32
    %c0_i32_0 = arith.constant 0 : i32
    %c0_i32_1 = arith.constant 0 : i32
    return %c0_i32, %c0_i32_0 : i32, i32
  }
  func.func @transform_3(%arg0: i32, %arg1: i32) -> (i32, i32, i32) {
    %c0_i32 = arith.constant 0 : i32
    %c0_i32_0 = arith.constant 0 : i32
    return %arg0, %c0_i32, %arg1 : i32, i32, i32
  }
}

</mosaic_0001>

<llo_original>
// kernel: gated_conv_transpose2d.1
$region0: #{gated_conv_transpose2d.1}
  #allocation0 [shape = 'u32[]', space=smem, size = 0x4, offset = 0x4, fixed_abs, tag = 'smem constant byte address 0x4 - core index']
  #allocation1 [shape = 'u32[144,128]{1,0:T(1,128)}', space=vmem, size = 0x12000, scoped, tag = 'internal scratch']
  #allocation2 [shape = 'f32[36,384]{1,0:T(8,128)}', space=vmem, size = 0xf000, scoped, tag = 'scratch operand']
  %s0 = inlined_call_operand.vmem [shape: f32[2,4,512], index: 0, kind: input, shape index: {}]
  %s1 = inlined_call_operand.vmem [shape: f32[8,36], index: 1, kind: input, shape index: {}]
  %s2 = inlined_call_operand.vmem [shape: f32[8,1], index: 2, kind: input, shape index: {}]
  %s3 = inlined_call_operand.vmem [shape: f32[2,4,384], index: 3, kind: output, shape index: {}]
  %s4 = sld [smem:[#allocation0]]
  $region45: #{gated_conv_transpose2d.1} parent=0
    _
  %s6 = ssub.s32 1, %s4
  %s7 = scalar_select 0, %s6, %s4
  loop: start=0, step=1, limit=4
  $region2: #{gated_conv_transpose2d.1} parent=0 // loop_pre_header
    _
  $region3: #{gated_conv_transpose2d.1} parent=0 // loop_header
    %s9 = sphi 0, %s13
    %p10 = scmp.ge.s32.totalorder %s9, 4
    %s16 = sphi 0, %s28
    %s17 = sphi 0, %s24
    %s18 = sphi 0, %s16
    %s19 = sphi 0, %s17
    %s20 = sphi 0, %s18
    %s21 = sphi 0, %s19
    %s31 = sphi 0, %s33
    %s34 = sphi 0, %s31
    %s35 = sphi 0, %s34
    %s51 = sphi 0, %s35
    %s55 = sphi 0, %s55
    %s57 = sphi 0, %s55
    %s58 = sphi 0, %s57
    %s72 = sphi 0, %s58
    %s76 = sphi 0, %s76
    %s78 = sphi 0, %s76
    %s79 = sphi 0, %s78
    %s93 = sphi 0, %s79
    %s101 = sphi 0, %s103
    %s104 = sphi 0, %s101
    %s105 = sphi 0, %s104
    %s121 = sphi 0, %s105
  $region4: #{gated_conv_transpose2d.1} parent=0 // loop_header_branch
    %12 = sbr.rel (%p10) target = $region8
  $region5: #{gated_conv_transpose2d.1} parent=0 // loop_body
    %s14 = ssub.s32 %s9, 1
    %s15 = ssub.s32 %s9, 2
    %s22 = sadd.s32 1, %s17
    %p23 = scmp.ge.s32.totalorder %s22, 1
    %s24 = scalar_select %p23, 0, %s22
    %s25 = sadd.s32 1, %s16
    %s26 = scalar_select %p23, %s25, %s16
    %p27 = scmp.ge.s32.totalorder %s26, 2
    %s28 = scalar_select %p27, 0, %s26
    %s29 = ssub.s32 %s16, %s28
    %p30 = scmp.eq.s32.totalorder %s29, 0
    %s32 = sadd.s32 %s31, 1
    %s33 = scalar_select %p30, %s31, %s32
    %p36 = pneg %p30
    %p37 = scmp.eq.s32.totalorder %s9, 1
    %p38 = por %p36, %p37
    %p39 = scmp.ne.s32.totalorder %s31, %s34
    %p40 = scmp.eq.s32.totalorder %s9, 0
    %p41 = por %p39, %p40
    %p42 = scmp.ne.s32.totalorder %s31, %s34
    %p43 = scmp.eq.s32.totalorder %s14, 1
    %p44 = por %p42, %p43
    %p45 = scmp.ne.s32.totalorder %s34, %s35
    %p46 = scmp.eq.s32.totalorder %s14, 0
    %p47 = por %p45, %p46
    %p48 = scmp.ne.s32.totalorder %s34, %s35
    %p49 = scmp.eq.s32.totalorder %s15, 1
    %p50 = por %p48, %p49
    %p52 = scmp.ne.s32.totalorder %s35, %s51
    %p53 = scmp.eq.s32.totalorder %s15, 0
    %p54 = por %p52, %p53
    %s56 = sadd.s32 %s55, 1
    %p59 = scmp.eq.s32.totalorder %s9, 1
    %p60 = scmp.ne.s32.totalorder %s55, %s57
    %p61 = scmp.eq.s32.totalorder %s9, 0
    %p62 = por %p60, %p61
    %p63 = scmp.ne.s32.totalorder %s55, %s57
    %p64 = scmp.eq.s32.totalorder %s14, 1
    %p65 = por %p63, %p64
    %p66 = scmp.ne.s32.totalorder %s57, %s58
    %p67 = scmp.eq.s32.totalorder %s14, 0
    %p68 = por %p66, %p67
    %p69 = scmp.ne.s32.totalorder %s57, %s58
    %p70 = scmp.eq.s32.totalorder %s15, 1
    %p71 = por %p69, %p70
    %p73 = scmp.ne.s32.totalorder %s58, %s72
    %p74 = scmp.eq.s32.totalorder %s15, 0
    %p75 = por %p73, %p74
    %s77 = sadd.s32 %s76, 1
    %p80 = scmp.eq.s32.totalorder %s9, 1
    %p81 = scmp.ne.s32.totalorder %s76, %s78
    %p82 = scmp.eq.s32.totalorder %s9, 0
    %p83 = por %p81, %p82
    %p84 = scmp.ne.s32.totalorder %s76, %s78
    %p85 = scmp.eq.s32.totalorder %s14, 1
    %p86 = por %p84, %p85
    %p87 = scmp.ne.s32.totalorder %s78, %s79
    %p88 = scmp.eq.s32.totalorder %s14, 0
    %p89 = por %p87, %p88
    %p90 = scmp.ne.s32.totalorder %s78, %s79
    %p91 = scmp.eq.s32.totalorder %s15, 1
    %p92 = por %p90, %p91
    %p94 = scmp.ne.s32.totalorder %s79, %s93
    %p95 = scmp.eq.s32.totalorder %s15, 0
    %p96 = por %p94, %p95
    %s97 = ssub.s32 %s16, %s28
    %s98 = ssub.s32 %s17, %s24
    %s99 = sor.u32 %s97, %s98
    %p100 = scmp.eq.s32.totalorder %s99, 0
    %s102 = sadd.s32 %s101, 1
    %s103 = scalar_select %p100, %s101, %s102
    %p106 = pneg %p100
    %p107 = scmp.eq.s32.totalorder %s9, 1
    %p108 = por %p106, %p107
    %p109 = scmp.ne.s32.totalorder %s101, %s104
    %p110 = scmp.eq.s32.totalorder %s9, 0
    %p111 = por %p109, %p110
    %p112 = scmp.ne.s32.totalorder %s101, %s104
    %p113 = scmp.eq.s32.totalorder %s14, 1
    %p114 = por %p112, %p113
    %p115 = scmp.ne.s32.totalorder %s104, %s105
    %p116 = scmp.eq.s32.totalorder %s14, 0
    %p117 = por %p115, %p116
    %p118 = scmp.ne.s32.totalorder %s104, %s105
    %p119 = scmp.eq.s32.totalorder %s15, 1
    %p120 = por %p118, %p119
    %p122 = scmp.ne.s32.totalorder %s105, %s121
    %p123 = scmp.eq.s32.totalorder %s15, 0
    %p124 = por %p122, %p123
    %p125 = scmp.le.s32.totalorder 1, %s9
    %p126 = scmp.lt.s32.totalorder %s9, 3
    %p127 = pnand %p125, %p126
    %p128 = pneg %p127
    // Predicated region
    $region9: #{gated_conv_transpose2d.1} parent=5 // pred_check
      _
    $region10: #{gated_conv_transpose2d.1} parent=5 // pred_check_branch
      %130 = sbr.rel (%p127) target = $region12
    $region11: #{gated_conv_transpose2d.1} parent=5 // pred_region
      %s131 = ssub.s32 %s9, 1
      // Predicated region
      $region13: #{gated_conv_transpose2d.1} parent=11 // pred_check
        %p132 = pneg %p68
      $region14: #{gated_conv_transpose2d.1} parent=11 // pred_check_branch
        %134 = sbr.rel (%p132) target = $region16
      $region15: #{gated_conv_transpose2d.1} parent=11 // pred_region
        _
      $region16: #{gated_conv_transpose2d.1} parent=11 // pred_fallthru
        _
      // Predicated region
      $region17: #{gated_conv_transpose2d.1} parent=11 // pred_check
        %p135 = pneg %p89
      $region18: #{gated_conv_transpose2d.1} parent=11 // pred_check_branch
        %137 = sbr.rel (%p135) target = $region20
      $region19: #{gated_conv_transpose2d.1} parent=11 // pred_region
        _
      $region20: #{gated_conv_transpose2d.1} parent=11 // pred_fallthru
        _
    $region12: #{gated_conv_transpose2d.1} parent=5 // pred_fallthru
      _
    %p138 = scmp.lt.s32.totalorder %s9, 2
    // Predicated region
    $region21: #{gated_conv_transpose2d.1} parent=5 // pred_check
      %p139 = pneg %p138
    $region22: #{gated_conv_transpose2d.1} parent=5 // pred_check_branch
      %141 = sbr.rel (%p139) target = $region24
    $region23: #{gated_conv_transpose2d.1} parent=5 // pred_region
      // Predicated region
      $region25: #{gated_conv_transpose2d.1} parent=23 // pred_check
        %p142 = pneg %p41
      $region26: #{gated_conv_transpose2d.1} parent=23 // pred_check_branch
        %144 = sbr.rel (%p142) target = $region28
      $region27: #{gated_conv_transpose2d.1} parent=23 // pred_region
        %p145 = scmp.lt.s32.totalorder %s16, 1
        %s146 = scalar_select %p145, %s16, 1
        %s147 = smul.addr %s146, 4
        %s148 = smul.addr %s147, 4
        %s149 = scalar_lea.vmem %s0, %s148
      $region28: #{gated_conv_transpose2d.1} parent=23 // pred_fallthru
        _
    $region24: #{gated_conv_transpose2d.1} parent=5 // pred_fallthru
      _
    %p150 = scmp.le.s32.totalorder 1, %s9
    %p151 = scmp.lt.s32.totalorder %s9, 3
    %p152 = pnand %p150, %p151
    %p153 = pneg %p152
    // Predicated region
    $region29: #{gated_conv_transpose2d.1} parent=5 // pred_check
      _
    $region30: #{gated_conv_transpose2d.1} parent=5 // pred_check_branch
      %155 = sbr.rel (%p152) target = $region32
    $region31: #{gated_conv_transpose2d.1} parent=5 // pred_region
      %s156 = ssub.s32 %s9, 1
      %p157 = scmp.lt.s32.totalorder %s18, 1
      %s158 = scalar_select %p157, %s18, 1
      %s159 = smul.addr %s158, 4
      %s160 = smul.addr %s159, 4
      %s161 = scalar_lea.vmem %s0, %s160
      %p162 = pneg %p47
      %p163 = pneg %p44
      %p164 = pneg %p68
      %p165 = pneg %p65
      %p166 = pneg %p89
      %p167 = pneg %p86
      %p168 = pneg %p117
      %p169 = pneg %p114
      %s170 = smul.u32 3, %s19
      %p171 = scmp.lt.s32.totalorder %s18, 1
      %s172 = scalar_select %p171, %s18, 1
      %p173 = scmp.lt.s32.totalorder %s170, 2
      %s174 = scalar_select %p173, %s170, 2
      %s175 = smul.addr %s172, 3
      %s176 = sadd.s32 %s174, %s175
      %s177 = smul.addr %s176, 4
      %s178 = scalar_lea.vmem %s3, %s177
      %p179 = scmp.lt.s32.totalorder %s18, 1
      %s180 = scalar_select %p179, %s18, 1
      %s181 = smul.addr %s180, 4
      %s182 = smul.addr %s181, 4
      %s183 = scalar_lea.vmem %s0, %s182
      %s184 = smul.u32 3, %s19
      %p185 = scmp.lt.s32.totalorder %s18, 1
      %s186 = scalar_select %p185, %s18, 1
      %p187 = scmp.lt.s32.totalorder %s184, 2
      %s188 = scalar_select %p187, %s184, 2
      %s189 = smul.addr %s186, 3
      %s190 = sadd.s32 %s188, %s189
      %s191 = smul.addr %s190, 4
      %s192 = scalar_lea.vmem %s3, %s191
      %s193 = smul.u32 3, %s19
      %s194 = smul.u32 %s19, 384
      %s195 = sshra.s32 %s194, 7
      %s196 = sand.u32 %s194, 127
      %s197 = smul.addr %s195, 4
      %s198 = scalar_lea.vmem %s183, %s197
      %v199 = vld [vmem:[%s198] sm:$0xff]
      %v200 = vld [vmem:[%s198 + $0x8] sm:$0xff]
      %v203 = vcombine.high %v199, %v199
      %205 = vst [vmem:[#allocation2] sm:$0xf] %v199
      %206 = vst [vmem:[#allocation2 + $0x8] sm:$0xf] %v203
      %207 = vst [vmem:[#allocation2 + $0x10] sm:$0xf] %v200
      %v208 = vcombine.low %v199, %v199
      %v209 = vcombine.low %v200, %v200
      %210 = vrot.lane.b32.xlu0 %v208, 127
      %v211 = vpop.permute.xlu0 %210
      %212 = vrot.lane.b32.xlu0 %v199, 127
      %v213 = vpop.permute.xlu0 %212
      %214 = vrot.lane.b32.xlu0 %v209, 127
      %v215 = vpop.permute.xlu0 %214
      %216 = vrot.lane.b32.xlu0 %v200, 127
      %v217 = vpop.permute.xlu0 %216
      %vm218 = vcmask 1039360
      %v219 = vsel %vm218, %v211, %v213
      %v220 = vsel %vm218, %v213, %v215
      %v221 = vsel %vm218, %v215, %v217
      %225 = vst [vmem:[#allocation2] sm:$0xf0] %v219
      %226 = vst [vmem:[#allocation2 + $0x8] sm:$0xf0] %v220
      %227 = vst [vmem:[#allocation2 + $0x10] sm:$0xf0] %v221
      %v228 = vcombine.high %v200, %v200
      %229 = vrot.lane.b32.xlu0 %v199, 126
      %v230 = vpop.permute.xlu0 %229
      %231 = vrot.lane.b32.xlu0 %v203, 126
      %v232 = vpop.permute.xlu0 %231
      %233 = vrot.lane.b32.xlu0 %v200, 126
      %v234 = vpop.permute.xlu0 %233
      %235 = vrot.lane.b32.xlu0 %v228, 126
      %v236 = vpop.permute.xlu0 %235
      %vm237 = vcmask 1031168
      %v238 = vsel %vm237, %v230, %v232
      %v239 = vsel %vm237, %v232, %v234
      %v240 = vsel %vm237, %v234, %v236
      %244 = vst [vmem:[#allocation2 + $0x18] sm:$0xf] %v238
      %245 = vst [vmem:[#allocation2 + $0x20] sm:$0xf] %v239
      %246 = vst [vmem:[#allocation2 + $0x28] sm:$0xf] %v240
      %247 = vrot.lane.b32.xlu0 %v208, 108
      %v248 = vpop.permute.xlu0 %247
      %249 = vrot.lane.b32.xlu0 %v199, 108
      %v250 = vpop.permute.xlu0 %249
      %251 = vrot.lane.b32.xlu0 %v209, 108
      %v252 = vpop.permute.xlu0 %251
      %253 = vrot.lane.b32.xlu0 %v200, 108
      %v254 = vpop.permute.xlu0 %253
      %vm255 = vcmask 883712
      %v256 = vsel %vm255, %v248, %v250
      %v257 = vsel %vm255, %v250, %v252
      %v258 = vsel %vm255, %v252, %v254
      %262 = vst [vmem:[#allocation2 + $0x18] sm:$0xf0] %v256
      %263 = vst [vmem:[#allocation2 + $0x20] sm:$0xf0] %v257
      %264 = vst [vmem:[#allocation2 + $0x28] sm:$0xf0] %v258
      %265 = vrot.lane.b32.xlu0 %v199, 107
      %v266 = vpop.permute.xlu0 %265
      %267 = vrot.lane.b32.xlu0 %v203, 107
      %v268 = vpop.permute.xlu0 %267
      %269 = vrot.lane.b32.xlu0 %v200, 107
      %v270 = vpop.permute.xlu0 %269
      %271 = vrot.lane.b32.xlu0 %v228, 107
      %v272 = vpop.permute.xlu0 %271
      %vm273 = vcmask 875520
      %v274 = vsel %vm273, %v266, %v268
      %v275 = vsel %vm273, %v268, %v270
      %v276 = vsel %vm273, %v270, %v272
      %280 = vst [vmem:[#allocation2 + $0x30] sm:$0xf] %v274
      %281 = vst [vmem:[#allocation2 + $0x38] sm:$0xf] %v275
      %282 = vst [vmem:[#allocation2 + $0x40] sm:$0xf] %v276
      %283 = vrot.lane.b32.xlu0 %v208, 106
      %v284 = vpop.permute.xlu0 %283
      %285 = vrot.lane.b32.xlu0 %v199, 106
      %v286 = vpop.permute.xlu0 %285
      %287 = vrot.lane.b32.xlu0 %v209, 106
      %v288 = vpop.permute.xlu0 %287
      %289 = vrot.lane.b32.xlu0 %v200, 106
      %v290 = vpop.permute.xlu0 %289
      %vm291 = vcmask 867328
      %v292 = vsel %vm291, %v284, %v286
      %v293 = vsel %vm291, %v286, %v288
      %v294 = vsel %vm291, %v288, %v290
      %298 = vst [vmem:[#allocation2 + $0x30] sm:$0xf0] %v292
      %299 = vst [vmem:[#allocation2 + $0x38] sm:$0xf0] %v293
      %300 = vst [vmem:[#allocation2 + $0x40] sm:$0xf0] %v294
      %301 = vrot.lane.b32.xlu0 %v199, 88
      %v302 = vpop.permute.xlu0 %301
      %303 = vrot.lane.b32.xlu0 %v203, 88
      %v304 = vpop.permute.xlu0 %303
      %305 = vrot.lane.b32.xlu0 %v200, 88
      %v306 = vpop.permute.xlu0 %305
      %307 = vrot.lane.b32.xlu0 %v228, 88
      %v308 = vpop.permute.xlu0 %307
      %vm309 = vcmask 719872
      %v310 = vsel %vm309, %v302, %v304
      %v311 = vsel %vm309, %v304, %v306
      %v312 = vsel %vm309, %v306, %v308
      %316 = vst [vmem:[#allocation2 + $0x48] sm:$0xf] %v310
      %317 = vst [vmem:[#allocation2 + $0x50] sm:$0xf] %v311
      %318 = vst [vmem:[#allocation2 + $0x58] sm:$0xf] %v312
      %319 = vrot.lane.b32.xlu0 %v208, 87
      %v320 = vpop.permute.xlu0 %319
      %321 = vrot.lane.b32.xlu0 %v199, 87
      %v322 = vpop.permute.xlu0 %321
      %323 = vrot.lane.b32.xlu0 %v209, 87
      %v324 = vpop.permute.xlu0 %323
      %325 = vrot.lane.b32.xlu0 %v200, 87
      %v326 = vpop.permute.xlu0 %325
      %vm327 = vcmask 711680
      %v328 = vsel %vm327, %v320, %v322
      %v329 = vsel %vm327, %v322, %v324
      %v330 = vsel %vm327, %v324, %v326
      %334 = vst [vmem:[#allocation2 + $0x48] sm:$0xf0] %v328
      %335 = vst [vmem:[#allocation2 + $0x50] sm:$0xf0] %v329
      %336 = vst [vmem:[#allocation2 + $0x58] sm:$0xf0] %v330
      %337 = vrot.lane.b32.xlu0 %v199, 86
      %v338 = vpop.permute.xlu0 %337
      %339 = vrot.lane.b32.xlu0 %v203, 86
      %v340 = vpop.permute.xlu0 %339
      %341 = vrot.lane.b32.xlu0 %v200, 86
      %v342 = vpop.permute.xlu0 %341
      %343 = vrot.lane.b32.xlu0 %v228, 86
      %v344 = vpop.permute.xlu0 %343
      %vm345 = vcmask 703488
      %v346 = vsel %vm345, %v338, %v340
      %v347 = vsel %vm345, %v340, %v342
      %v348 = vsel %vm345, %v342, %v344
      %352 = vst [vmem:[#allocation2 + $0x60] sm:$0xf] %v346
      %353 = vst [vmem:[#allocation2 + $0x68] sm:$0xf] %v347
      %354 = vst [vmem:[#allocation2 + $0x70] sm:$0xf] %v348
      %v355 = vld [vmem:[%s1] sm:$0xff]
      %v356 = vld [vmem:[#allocation2] sm:$0xff]
      %v357 = vld [vmem:[#allocation2 + $0x8] sm:$0xff]
      %v358 = vld [vmem:[#allocation2 + $0x10] sm:$0xff]
      %v359 = vld [vmem:[#allocation2 + $0x18] sm:$0xff]
      %v360 = vld [vmem:[#allocation2 + $0x20] sm:$0xff]
      %v361 = vld [vmem:[#allocation2 + $0x28] sm:$0xff]
      %v362 = vld [vmem:[#allocation2 + $0x30] sm:$0xff]
      %v363 = vld [vmem:[#allocation2 + $0x38] sm:$0xff]
      %v364 = vld [vmem:[#allocation2 + $0x40] sm:$0xff]
      %v365 = vld [vmem:[#allocation2 + $0x48] sm:$0xff]
      %v366 = vld [vmem:[#allocation2 + $0x50] sm:$0xff]
      %v367 = vld [vmem:[#allocation2 + $0x58] sm:$0xff]
      %v368 = vld [vmem:[#allocation2 + $0x60] sm:$0xf]
      %v369 = vld [vmem:[#allocation2 + $0x68] sm:$0xf]
      %v370 = vld [vmem:[#allocation2 + $0x70] sm:$0xf]
      %v371 = vld [vmem:[%s2] sm:$0xff]
      %373 = vset.pattern.permute.xlu0 0
      %374 = vperm.xlu0 %373, %v371
      %v375 = vpop.permute.xlu0 %374
      %vm377 = vcmask 293888
      %v379 = vsel %vm377, %v355, 0
      %vm381 = vcmask 1043456
      %v383 = vsel %vm381, %v368, 0
      %v386 = vsel %vm381, %v369, 0
      %v389 = vsel %vm381, %v370, 0
      %391 = vmatprep.subr.mxu0 0.0
      %392 = vmatpush1.msra.mxu0 0.0
      %393 = vmatprep.subr.mxu0 0.0
      %394 = vmatpush1.msra.mxu0 0.0
      %395 = vmatprep.subr.mxu0 0.0
      %396 = vmatpush1.msra.mxu0 0.0
      %397 = vmatprep.subr.mxu0 0.0
      %398 = vmatpush1.msra.mxu0 0.0
      %399 = vmatprep.subr.mxu0 0.0
      %400 = vmatpush1.msra.mxu0 0.0
      %401 = vmatprep.subr.mxu0 0.0
      %402 = vmatpush1.msra.mxu0 0.0
      %403 = vmatprep.subr.mxu0 0.0
      %404 = vmatpush1.msra.mxu0 0.0
      %405 = vmatprep.subr.mxu0 0.0
      %406 = vmatpush1.msra.mxu0 0.0
      %407 = vmatprep.subr.mxu0 0.0
      %408 = vmatpush1.msra.mxu0 0.0
      %409 = vmatprep.subr.mxu0 0.0
      %410 = vmatpush1.msra.mxu0 0.0
      %411 = vmatprep.subr.mxu0 0.0
      %412 = vmatpush1.msra.mxu0 0.0
      %413 = vmatprep.subr.mxu0 %v386
      %414 = vmatpush1.msra.mxu0 %v383
      %415 = vmatprep.subr.mxu0 %v366
      %416 = vmatpush1.msra.mxu0 %v365
      %417 = vmatprep.subr.mxu0 %v363
      %418 = vmatpush1.msra.mxu0 %v362
      %419 = vmatprep.subr.mxu0 %v360
      %420 = vmatpush1.msra.mxu0 %v359
      %421 = vmatprep.subr.mxu0 %v357
      %422 = vmatpush1.msra.mxu0 %v356
      %423 = vmatprep.subr.mxu0 0.0
      %424 = vmatpush2.msra.mxu0 0.0
      %425 = vmatprep.subr.mxu0 0.0
      %426 = vmatpush2.msra.mxu0 0.0
      %427 = vmatprep.subr.mxu0 0.0
      %428 = vmatpush2.msra.mxu0 0.0
      %429 = vmatprep.subr.mxu0 0.0
      %430 = vmatpush2.msra.mxu0 0.0
      %431 = vmatprep.subr.mxu0 0.0
      %432 = vmatpush2.msra.mxu0 0.0
      %433 = vmatprep.subr.mxu0 0.0
      %434 = vmatpush2.msra.mxu0 0.0
      %435 = vmatprep.subr.mxu0 0.0
      %436 = vmatpush2.msra.mxu0 0.0
      %437 = vmatprep.subr.mxu0 0.0
      %438 = vmatpush2.msra.mxu0 0.0
      %439 = vmatprep.subr.mxu0 0.0
      %440 = vmatpush2.msra.mxu0 0.0
      %441 = vmatprep.subr.mxu0 0.0
      %442 = vmatpush2.msra.mxu0 0.0
      %443 = vmatprep.subr.mxu0 0.0
      %444 = vmatpush2.msra.mxu0 0.0
      %445 = vmatprep.subr.mxu0 0.0
      %446 = vmatpush2.msra.mxu0 0.0
      %447 = vmatprep.subr.mxu0 0.0
      %448 = vmatpush2.msra.mxu0 0.0
      %449 = vmatprep.subr.mxu0 0.0
      %450 = vmatpush2.msra.mxu0 0.0
      %451 = vmatprep.subr.mxu0 0.0
      %452 = vmatpush2.msra.mxu0 0.0
      %453 = vmatprep.subr.mxu0 0.0
      %454 = vmatpush2.msra.mxu0 0.0
      %455 = vmatprep.mubr.f32.mxu0 0.0
      %456 = vmatmul.mubr.f32.gmra.mxu0 %v379
      %v457 = vpop.f32.mrf.mxu0
      %v458 = vadd.f32 %v375, %v457
      %v459 = vpop.f32.mrf.mxu0
      %v460 = vadd.f32 %v375, %v459
      %461 = vdwg.mxu0
      %462 = vmatprep.subr.mxu0 0.0
      %463 = vmatpush1.msra.mxu0 0.0
      %464 = vmatprep.subr.mxu0 0.0
      %465 = vmatpush1.msra.mxu0 0.0
      %466 = vmatprep.subr.mxu0 0.0
      %467 = vmatpush1.msra.mxu0 0.0
      %468 = vmatprep.subr.mxu0 0.0
      %469 = vmatpush1.msra.mxu0 0.0
      %470 = vmatprep.subr.mxu0 0.0
      %471 = vmatpush1.msra.mxu0 0.0
      %472 = vmatprep.subr.mxu0 0.0
      %473 = vmatpush1.msra.mxu0 0.0
      %474 = vmatprep.subr.mxu0 0.0
      %475 = vmatpush1.msra.mxu0 0.0
      %476 = vmatprep.subr.mxu0 0.0
      %477 = vmatpush1.msra.mxu0 0.0
      %478 = vmatprep.subr.mxu0 0.0
      %479 = vmatpush1.msra.mxu0 0.0
      %480 = vmatprep.subr.mxu0 0.0
      %481 = vmatpush1.msra.mxu0 0.0
      %482 = vmatprep.subr.mxu0 0.0
      %483 = vmatpush1.msra.mxu0 0.0
      %484 = vmatprep.subr.mxu0 0.0
      %485 = vmatpush1.msra.mxu0 %v389
      %486 = vmatprep.subr.mxu0 0.0
      %487 = vmatpush1.msra.mxu0 %v367
      %488 = vmatprep.subr.mxu0 0.0
      %489 = vmatpush1.msra.mxu0 %v364
      %490 = vmatprep.subr.mxu0 0.0
      %491 = vmatpush1.msra.mxu0 %v361
      %492 = vmatprep.subr.mxu0 0.0
      %493 = vmatpush1.msra.mxu0 %v358
      %494 = vmatprep.subr.mxu0 0.0
      %495 = vmatpush2.msra.mxu0 0.0
      %496 = vmatprep.subr.mxu0 0.0
      %497 = vmatpush2.msra.mxu0 0.0
      %498 = vmatprep.subr.mxu0 0.0
      %499 = vmatpush2.msra.mxu0 0.0
      %500 = vmatprep.subr.mxu0 0.0
      %501 = vmatpush2.msra.mxu0 0.0
      %502 = vmatprep.subr.mxu0 0.0
      %503 = vmatpush2.msra.mxu0 0.0
      %504 = vmatprep.subr.mxu0 0.0
      %505 = vmatpush2.msra.mxu0 0.0
      %506 = vmatprep.subr.mxu0 0.0
      %507 = vmatpush2.msra.mxu0 0.0
      %508 = vmatprep.subr.mxu0 0.0
      %509 = vmatpush2.msra.mxu0 0.0
      %510 = vmatprep.subr.mxu0 0.0
      %511 = vmatpush2.msra.mxu0 0.0
      %512 = vmatprep.subr.mxu0 0.0
      %513 = vmatpush2.msra.mxu0 0.0
      %514 = vmatprep.subr.mxu0 0.0
      %515 = vmatpush2.msra.mxu0 0.0
      %516 = vmatprep.subr.mxu0 0.0
      %517 = vmatpush2.msra.mxu0 0.0
      %518 = vmatprep.subr.mxu0 0.0
      %519 = vmatpush2.msra.mxu0 0.0
      %520 = vmatprep.subr.mxu0 0.0
      %521 = vmatpush2.msra.mxu0 0.0
      %522 = vmatprep.subr.mxu0 0.0
      %523 = vmatpush2.msra.mxu0 0.0
      %524 = vmatprep.subr.mxu0 0.0
      %525 = vmatpush2.msra.mxu0 0.0
      %526 = vmatprep.mubr.f32.mxu0 0.0
      %527 = vmatmul.mubr.f32.gmra.mxu0 %v379
      %v528 = vpop.f32.mrf.mxu0
      %v529 = vadd.f32 %v375, %v528
      %v530 = vpop.f32.mrf.mxu0
      %531 = vdwg.mxu0
      %v532 = vmul.f32 %v458, 0.16666667
      %v533 = vmul.f32 %v460, 0.16666667
      %v534 = vmul.f32 %v529, 0.16666667
      %v535 = vadd.f32 %v532, 0.5
      %v536 = vadd.f32 %v533, 0.5
      %v537 = vadd.f32 %v534, 0.5
      %v538 = vmax.f32 %v535, 0.0
      %v539 = vmax.f32 %v536, 0.0
      %v540 = vmax.f32 %v537, 0.0
      %v541 = vmin.f32 %v538, 1.0
      %v542 = vmin.f32 %v539, 1.0
      %v543 = vmin.f32 %v540, 1.0
      %v547 = vrot.slane %v541, 4
      %v548 = vrot.slane %v542, 4
      %v549 = vrot.slane %v543, 4
      %v553 = vmul.f32 %v458, %v547
      %v554 = vmul.f32 %v460, %v548
      %v555 = vmul.f32 %v529, %v549
      %v558 = vcombine.low %v553, %v554
      %560 = vst [vmem:[%s192] sm:$0xff] %v558
      %561 = vst [vmem:[%s192 + $0x8] sm:$0xf] %v555
      %s562 = smul.u32 3, %s19
      %p563 = scmp.lt.s32.totalorder %s18, 1
      %s564 = scalar_select %p563, %s18, 1
      %p565 = scmp.lt.s32.totalorder %s562, 2
      %s566 = scalar_select %p565, %s562, 2
      %s567 = smul.addr %s564, 3
      %s568 = sadd.s32 %s566, %s567
      %s569 = smul.addr %s568, 4
      %s570 = scalar_lea.vmem %s3, %s569
      // Predicated region
      $region33: #{gated_conv_transpose2d.1} parent=31 // pred_check
        %p571 = pneg %p114
      $region34: #{gated_conv_transpose2d.1} parent=31 // pred_check_branch
        %573 = sbr.rel (%p571) target = $region36
      $region35: #{gated_conv_transpose2d.1} parent=31 // pred_region
        %s574 = smul.u32 3, %s19
      $region36: #{gated_conv_transpose2d.1} parent=31 // pred_fallthru
        _
    $region32: #{gated_conv_transpose2d.1} parent=5 // pred_fallthru
      _
    %p575 = scmp.le.s32.totalorder 2, %s9
    // Predicated region
    $region37: #{gated_conv_transpose2d.1} parent=5 // pred_check
      %p576 = pneg %p575
    $region38: #{gated_conv_transpose2d.1} parent=5 // pred_check_branch
      %578 = sbr.rel (%p576) target = $region40
    $region39: #{gated_conv_transpose2d.1} parent=5 // pred_region
      %s579 = ssub.s32 %s9, 2
      // Predicated region
      $region41: #{gated_conv_transpose2d.1} parent=39 // pred_check
        %p580 = pneg %p120
      $region42: #{gated_conv_transpose2d.1} parent=39 // pred_check_branch
        %582 = sbr.rel (%p580) target = $region44
      $region43: #{gated_conv_transpose2d.1} parent=39 // pred_region
        %s583 = smul.u32 3, %s21
        %p584 = scmp.lt.s32.totalorder %s20, 1
        %s585 = scalar_select %p584, %s20, 1
        %p586 = scmp.lt.s32.totalorder %s583, 2
        %s587 = scalar_select %p586, %s583, 2
        %s588 = smul.addr %s585, 3
        %s589 = sadd.s32 %s587, %s588
        %s590 = smul.addr %s589, 4
        %s591 = scalar_lea.vmem %s3, %s590
      $region44: #{gated_conv_transpose2d.1} parent=39 // pred_fallthru
        _
    $region40: #{gated_conv_transpose2d.1} parent=5 // pred_fallthru
      _
  $region6: #{gated_conv_transpose2d.1} parent=0 // loop_footer
    %s13 = sadd.s32 1, %s9
  $region7: #{gated_conv_transpose2d.1} parent=0 // loop_footer_branch
    %8 = sbr.rel target = $region3
  $region8: #{gated_conv_transpose2d.1} parent=0 // loop_exit
    _

</llo_original>
